<compile_context>
chip_gen: v7x
topology: tpu7x:2x2x1
jax: 0.10.0
libtpu: 0.0.40
codegen_flags: <defaults>
</compile_context>

<pallas_src>
import math

import jax
import jax.numpy as jnp
from jax.experimental import pallas as pl
from jax.experimental.pallas import tpu as pltpu


def _round_up(x, m):
    return (x + m - 1) // m * m


def _pick_nk_tile(padded, cap=512):
    """Largest multiple-of-128 tile <= cap that divides `padded` (padded % 128 == 0)."""
    t = min(padded, cap)
    while padded % t:
        t -= 128
    return t


def _pick_m_tile(M, cap):
    """Multiple-of-16 row tile (bf16 A operand) that minimizes row padding."""
    cap = max(16, cap - cap % 16)
    if M <= cap:
        return _round_up(M, 16)
    best_t, best_pad = 16, _round_up(M, 16) - M
    for t in range(16, cap + 1, 16):
        pad = _round_up(M, t) - M
        if pad < best_pad or (pad == best_pad and t > best_t):
            best_t, best_pad = t, pad
    return best_t


# ---------------------------------------------------------------------------
# Fast path: W fully resident in VMEM, grid = (M blocks,), no K axis.
# x_ref: (TM, Cp) f32 (A operand + residual), w_ref: (Cp, Cp) bf16,
# b_ref: (1, Cp) f32, o_ref: (TM, Cp) f32.
# ---------------------------------------------------------------------------
def _resblock_resident_kernel(x_ref, w_ref, b_ref, o_ref):
    x = x_ref[...]
    acc = jnp.dot(x.astype(jnp.bfloat16), w_ref[...],
                  preferred_element_type=jnp.float32)
    o_ref[...] = jnp.maximum(acc + b_ref[...], 0.0) + x


# ---------------------------------------------------------------------------
# Fallback for large C: tiled (M, N, K) grid, accumulate into the K-invariant
# f32 output block, epilogue (bias + ReLU + residual) on the last K step.
# ---------------------------------------------------------------------------
def _resblock_tiled_kernel(x_ref, w_ref, b_ref, r_ref, o_ref):
    @pl.when(pl.program_id(2) == 0)
    def _():
        o_ref[...] = jnp.zeros_like(o_ref)

    o_ref[...] += jnp.dot(x_ref[...].astype(jnp.bfloat16), w_ref[...],
                          preferred_element_type=jnp.float32)

    @pl.when(pl.program_id(2) == pl.num_programs(2) - 1)
    def _():
        o_ref[...] = jnp.maximum(o_ref[...] + b_ref[...], 0.0) + r_ref[...]


def make_residual_block(W, b, *, m_tile_cap=512, nk_tile_cap=512,
                        resident_w_max_cp=2048):
    """Build the ResidualBlock apply fn.

    W: (C, C) nn.Linear weight (out_features, in_features); b: (C,) bias.
    Weight transpose / padding / bf16 cast are hoisted here (done once).
    Returns apply(x) with x of shape (B, C) -> (B, C) float32.
    """
    C_out, C_in = W.shape
    assert C_out == C_in, "ResidualBlock uses a square Linear(channels, channels)"
    C = C_in
    Cp = _round_up(C, 128)

    # Hoisted weight prep: (out, in) -> (in, out) = (K, N), zero-pad, bf16 for MXU.
    Wt = jnp.pad(W.T.astype(jnp.bfloat16), ((0, Cp - C), (0, Cp - C)))
    bp = jnp.pad(b.astype(jnp.float32), (0, Cp - C)).reshape(1, Cp)

    resident = Cp <= resident_w_max_cp  # bf16 W <= ~8 MiB -> keep whole W in VMEM

    @jax.jit
    def apply(x):
        M, K = x.shape
        assert K == C

        TM = _pick_m_tile(M, m_tile_cap)
        # v7x has 2 TensorCores: keep >= 2 blocks on the parallel M axis when
        # there is enough work to split.
        if M >= 32 and _round_up(M, TM) // TM < 2:
            TM = _round_up((M + 1) // 2, 16)
        Mp = _round_up(M, TM)

        # Single f32 activation stream (A operand + residual). bf16 cast happens
        # inside the kernel; padding skipped entirely when already aligned.
        if Mp == M and Cp == C:
            xp = x.astype(jnp.float32)
        else:
            xp = jnp.pad(x.astype(jnp.float32), ((0, Mp - M), (0, Cp - C)))

        flops = 2 * Mp * Cp * Cp

        if resident:
            grid = (Mp // TM,)
            bytes_accessed = Mp * Cp * 4 + Cp * Cp * 2 + Cp * 4 + Mp * Cp * 4
            vmem_est = 2 * (Cp * Cp * 2) + 2 * (TM * Cp * 4) * 2 + 2 * Cp * 4
            out = pl.pallas_call(
                _resblock_resident_kernel,
                out_shape=jax.ShapeDtypeStruct((Mp, Cp), jnp.float32),
                grid_spec=pltpu.PrefetchScalarGridSpec(
                    num_scalar_prefetch=0,
                    grid=grid,
                    in_specs=[
                        pl.BlockSpec((TM, Cp), lambda i: (i, 0)),   # x (A + residual)
                        pl.BlockSpec((Cp, Cp), lambda i: (0, 0)),   # resident W^T
                        pl.BlockSpec((1, Cp), lambda i: (0, 0)),    # bias
                    ],
                    out_specs=pl.BlockSpec((TM, Cp), lambda i: (i, 0)),
                ),
                compiler_params=pltpu.CompilerParams(
                    dimension_semantics=("parallel",),
                    vmem_limit_bytes=min(64 << 20,
                                         max(32 << 20, vmem_est + (4 << 20)))),
                cost_estimate=pl.CostEstimate(
                    flops=flops, transcendentals=0,
                    bytes_accessed=bytes_accessed),
            )(xp, Wt, bp)
        else:
            TN = _pick_nk_tile(Cp, nk_tile_cap)
            TK = TN  # K == N == C: shared tile keeps padded shapes aligned
            grid = (Mp // TM, Cp // TN, Cp // TK)
            bytes_accessed = ((Cp // TN) * Mp * Cp * 4   # A tiles (re-read per N block)
                              + (Mp // TM) * Cp * Cp * 2  # W tiles (re-read per M block)
                              + Mp * Cp * 4               # residual
                              + Cp * 4                    # bias
                              + Mp * Cp * 4)              # output
            vmem_est = 2 * (TM * TK * 4 + TK * TN * 2 + TN * 4
                            + TM * TN * 4 + TM * TN * 4)
            out = pl.pallas_call(
                _resblock_tiled_kernel,
                out_shape=jax.ShapeDtypeStruct((Mp, Cp), jnp.float32),
                grid_spec=pltpu.PrefetchScalarGridSpec(
                    num_scalar_prefetch=0,
                    grid=grid,
                    in_specs=[
                        pl.BlockSpec((TM, TK), lambda i, j, k: (i, k)),  # x (A)
                        # Tuning option: pipeline_mode=pl.Buffered(3) on W if
                        # profiling shows exposed W DMA (v5e).
                        pl.BlockSpec((TK, TN), lambda i, j, k: (k, j)),  # W^T
                        pl.BlockSpec((1, TN), lambda i, j, k: (0, j)),   # bias
                        pl.BlockSpec((TM, TN), lambda i, j, k: (i, j)),  # residual
                    ],
                    out_specs=pl.BlockSpec((TM, TN), lambda i, j, k: (i, j)),
                ),
                compiler_params=pltpu.CompilerParams(
                    dimension_semantics=("parallel", "parallel", "arbitrary"),
                    vmem_limit_bytes=min(64 << 20,
                                         max(32 << 20, vmem_est + (4 << 20)))),
                cost_estimate=pl.CostEstimate(
                    flops=flops, transcendentals=0,
                    bytes_accessed=bytes_accessed),
            )(xp, Wt, bp, xp)

        if Mp == M and Cp == C:
            return out
        return out[:M, :C]

    return apply


if __name__ == "__main__":
    # Small shapes consistent with the module: batch=2, channels=256.
    B, C = 2, 256
    key = jax.random.PRNGKey(0)
    kx, kw, kb = jax.random.split(key, 3)
    x = jax.random.normal(kx, (B, C), jnp.float32)
    W = jax.random.normal(kw, (C, C), jnp.float32) / math.sqrt(C)
    b = 0.01 * jax.random.normal(kb, (C,), jnp.float32)

    block = make_residual_block(W, b)
    out = jax.block_until_ready(block(x))

    # Reference (f32). Kernel uses bf16 MXU operands with f32 accumulation and
    # f32 epilogue -> loose tolerance is an intentional fidelity trade, not a bug.
    ref = jnp.maximum(x @ W.T + b, 0.0) + x
    assert out.shape == (B, C)
    assert bool(jnp.max(jnp.abs(out - ref)) < 1e-1), float(jnp.max(jnp.abs(out - ref)))

    print("KERNEL_OK")
</pallas_src>

<mosaic_0001>
module attributes {stable_mosaic.version = 11 : i64} {
  func.func @_resblock_resident_kernel(%arg0: i32, %arg1: memref<16x256xf32, #tpu.memory_space<vmem>>, %arg2: memref<256x256xbf16, #tpu.memory_space<vmem>>, %arg3: memref<1x256xf32, #tpu.memory_space<vmem>>, %arg4: memref<16x256xf32, #tpu.memory_space<vmem>>) attributes {dimension_semantics = [#tpu.dimension_semantics<parallel>], iteration_bounds = array<i64: 1>, scalar_prefetch = 0 : i64, scratch_operands = 0 : i64, tpu.core_type = #tpu.core_type<tc>, window_params = [{transform_indices = @transform_0, window_bounds = array<i64: 16, 256>}, {pipeline_mode = #tpu.pipeline_mode<synchronous>, transform_indices = @transform_1, window_bounds = array<i64: 256, 256>}, {pipeline_mode = #tpu.pipeline_mode<synchronous>, transform_indices = @transform_2, window_bounds = array<i64: 1, 256>}, {transform_indices = @transform_3, window_bounds = array<i64: 16, 256>}]} {
    %c0 = arith.constant 0 : index
    %c0_0 = arith.constant 0 : index
    %0 = vector.load %arg1[%c0, %c0_0] : memref<16x256xf32, #tpu.memory_space<vmem>>, vector<16x256xf32>
    %1 = arith.truncf %0 : vector<16x256xf32> to vector<16x256xbf16>
    %c0_1 = arith.constant 0 : index
    %c0_2 = arith.constant 0 : index
    %2 = vector.load %arg2[%c0_1, %c0_2] : memref<256x256xbf16, #tpu.memory_space<vmem>>, vector<256x256xbf16>
    %cst = arith.constant dense<0.000000e+00> : vector<16x256xf32>
    %3 = tpu.matmul %1, %2, %cst {dimension_numbers = #tpu.dot_dimension_numbers<[1], [0], [0], [1], [0, 0, 1, 1], [], []>} : vector<16x256xbf16>, vector<256x256xbf16>, vector<16x256xf32> -> vector<16x256xf32>
    %c0_3 = arith.constant 0 : index
    %c0_4 = arith.constant 0 : index
    %4 = vector.load %arg3[%c0_3, %c0_4] : memref<1x256xf32, #tpu.memory_space<vmem>>, vector<1x256xf32>
    %5 = vector.broadcast %4 : vector<1x256xf32> to vector<16x256xf32>
    %6 = arith.addf %3, %5 : vector<16x256xf32>
    %cst_5 = arith.constant 0.000000e+00 : f32
    %7 = vector.broadcast %cst_5 : f32 to vector<16x256xf32>
    %8 = arith.maximumf %6, %7 : vector<16x256xf32>
    %9 = arith.addf %8, %0 : vector<16x256xf32>
    %c0_6 = arith.constant 0 : index
    %c0_7 = arith.constant 0 : index
    %10 = vector.load %arg4[%c0_6, %c0_7] : memref<16x256xf32, #tpu.memory_space<vmem>>, vector<16x256xf32>
    tpu.vector_store %arg4[%c0_6, %c0_7], %9 {strides = array<i32>} : memref<16x256xf32, #tpu.memory_space<vmem>>, vector<16x256xf32>,
    return
  }
  func.func @transform_0(%arg0: i32) -> (i32, i32) {
    %c0_i32 = arith.constant 0 : i32
    %c0_i32_0 = arith.constant 0 : i32
    return %arg0, %c0_i32 : i32, i32
  }
  func.func @transform_1(%arg0: i32) -> (i32, i32) {
    %c0_i32 = arith.constant 0 : i32
    %c0_i32_0 = arith.constant 0 : i32
    %c0_i32_1 = arith.constant 0 : i32
    return %c0_i32, %c0_i32_0 : i32, i32
  }
  func.func @transform_2(%arg0: i32) -> (i32, i32) {
    %c0_i32 = arith.constant 0 : i32
    %c0_i32_0 = arith.constant 0 : i32
    %c0_i32_1 = arith.constant 0 : i32
    return %c0_i32, %c0_i32_0 : i32, i32
  }
  func.func @transform_3(%arg0: i32) -> (i32, i32) {
    %c0_i32 = arith.constant 0 : i32
    %c0_i32_0 = arith.constant 0 : i32
    return %arg0, %c0_i32 : i32, i32
  }
}

</mosaic_0001>

<llo_original>
// kernel: apply.1
$region0: #{apply.1}
  #allocation0 [shape = 'u32[]', space=smem, size = 0x4, offset = 0x4, fixed_abs, tag = 'smem constant byte address 0x4 - core index']
  #allocation1 [shape = 'u32[144,128]{1,0:T(1,128)}', space=vmem, size = 0x12000, scoped, tag = 'internal scratch']
  %s0 = inlined_call_operand.vmem [shape: f32[16,256], index: 0, kind: input, shape index: {}]
  %s1 = inlined_call_operand.vmem [shape: bf16[256,256], index: 1, kind: input, shape index: {}]
  %s2 = inlined_call_operand.vmem [shape: f32[1,256], index: 2, kind: input, shape index: {}]
  %s3 = inlined_call_operand.vmem [shape: f32[16,256], index: 3, kind: output, shape index: {}]
  %s4 = sld [smem:[#allocation0]]
  $region22: #{apply.1} parent=0
    _
  %s6 = ssub.s32 1, %s4
  %s7 = scalar_select 0, %s6, %s4
  // Predicated region
  $region2: #{apply.1} parent=0 // pred_check
    _
  $region3: #{apply.1} parent=0 // pred_check_branch
    %9 = sbr.rel (0) target = $region5
  $region4: #{apply.1} parent=0 // pred_region
    _
  $region5: #{apply.1} parent=0 // pred_fallthru
    _
  // Predicated region
  $region6: #{apply.1} parent=0 // pred_check
    _
  $region7: #{apply.1} parent=0 // pred_check_branch
    %11 = sbr.rel (0) target = $region9
  $region8: #{apply.1} parent=0 // pred_region
    _
  $region9: #{apply.1} parent=0 // pred_fallthru
    _
  // Predicated region
  $region10: #{apply.1} parent=0 // pred_check
    _
  $region11: #{apply.1} parent=0 // pred_check_branch
    %13 = sbr.rel (0) target = $region13
  $region12: #{apply.1} parent=0 // pred_region
    _
  $region13: #{apply.1} parent=0 // pred_fallthru
    _
  %v14 = vld [vmem:[%s0] sm:$0xff]
  %v15 = vld [vmem:[%s0 + $0x8] sm:$0xff]
  %v16 = vld [vmem:[%s0 + $0x10] sm:$0xff]
  %v17 = vld [vmem:[%s0 + $0x18] sm:$0xff]
  %v18 = vpack.c.bf16 %v16, %v14
  %v19 = vpack.c.bf16 %v17, %v15
  %v20 = vld [vmem:[%s1] sm:$0xff]
  %v21 = vld [vmem:[%s1 + $0x8] sm:$0xff]
  %v22 = vld [vmem:[%s1 + $0x10] sm:$0xff]
  %v23 = vld [vmem:[%s1 + $0x18] sm:$0xff]
  %v24 = vld [vmem:[%s1 + $0x20] sm:$0xff]
  %v25 = vld [vmem:[%s1 + $0x28] sm:$0xff]
  %v26 = vld [vmem:[%s1 + $0x30] sm:$0xff]
  %v27 = vld [vmem:[%s1 + $0x38] sm:$0xff]
  %v28 = vld [vmem:[%s1 + $0x40] sm:$0xff]
  %v29 = vld [vmem:[%s1 + $0x48] sm:$0xff]
  %v30 = vld [vmem:[%s1 + $0x50] sm:$0xff]
  %v31 = vld [vmem:[%s1 + $0x58] sm:$0xff]
  %v32 = vld [vmem:[%s1 + $0x60] sm:$0xff]
  %v33 = vld [vmem:[%s1 + $0x68] sm:$0xff]
  %v34 = vld [vmem:[%s1 + $0x70] sm:$0xff]
  %v35 = vld [vmem:[%s1 + $0x78] sm:$0xff]
  %v36 = vld [vmem:[%s1 + $0x80] sm:$0xff]
  %v37 = vld [vmem:[%s1 + $0x88] sm:$0xff]
  %v38 = vld [vmem:[%s1 + $0x90] sm:$0xff]
  %v39 = vld [vmem:[%s1 + $0x98] sm:$0xff]
  %v40 = vld [vmem:[%s1 + $0xa0] sm:$0xff]
  %v41 = vld [vmem:[%s1 + $0xa8] sm:$0xff]
  %v42 = vld [vmem:[%s1 + $0xb0] sm:$0xff]
  %v43 = vld [vmem:[%s1 + $0xb8] sm:$0xff]
  %v44 = vld [vmem:[%s1 + $0xc0] sm:$0xff]
  %v45 = vld [vmem:[%s1 + $0xc8] sm:$0xff]
  %v46 = vld [vmem:[%s1 + $0xd0] sm:$0xff]
  %v47 = vld [vmem:[%s1 + $0xd8] sm:$0xff]
  %v48 = vld [vmem:[%s1 + $0xe0] sm:$0xff]
  %v49 = vld [vmem:[%s1 + $0xe8] sm:$0xff]
  %v50 = vld [vmem:[%s1 + $0xf0] sm:$0xff]
  %v51 = vld [vmem:[%s1 + $0xf8] sm:$0xff]
  %v52 = vld [vmem:[%s2] sm:$0x3]
  %v54 = vlaneseq
  %v55 = vshrl.u32 %v54, 7
  %v56 = vsub.s32 0, %v55
  %v57 = vrot.slane %v52, %v56
  %v58 = vlaneseq
  %v59 = vshrl.u32 %v58, 7
  %v60 = vsub.s32 1, %v59
  %v61 = vrot.slane %v52, %v60
  %v96 = vunpack.c.l.b16 %v20
  %v97 = vunpack.c.h.b16 %v20
  %v98 = vunpack.c.l.b16 %v21
  %v99 = vunpack.c.h.b16 %v21
  %v100 = vunpack.c.l.b16 %v22
  %v101 = vunpack.c.h.b16 %v22
  %v102 = vunpack.c.l.b16 %v23
  %v103 = vunpack.c.h.b16 %v23
  %v104 = vunpack.c.l.b16 %v24
  %v105 = vunpack.c.h.b16 %v24
  %v106 = vunpack.c.l.b16 %v25
  %v107 = vunpack.c.h.b16 %v25
  %v108 = vunpack.c.l.b16 %v26
  %v109 = vunpack.c.h.b16 %v26
  %v110 = vunpack.c.l.b16 %v27
  %v111 = vunpack.c.h.b16 %v27
  %v112 = vunpack.c.l.b16 %v28
  %v113 = vunpack.c.h.b16 %v28
  %v114 = vunpack.c.l.b16 %v29
  %v115 = vunpack.c.h.b16 %v29
  %v116 = vunpack.c.l.b16 %v30
  %v117 = vunpack.c.h.b16 %v30
  %v118 = vunpack.c.l.b16 %v31
  %v119 = vunpack.c.h.b16 %v31
  %v120 = vunpack.c.l.b16 %v32
  %v121 = vunpack.c.h.b16 %v32
  %v122 = vunpack.c.l.b16 %v33
  %v123 = vunpack.c.h.b16 %v33
  %v124 = vunpack.c.l.b16 %v34
  %v125 = vunpack.c.h.b16 %v34
  %v126 = vunpack.c.l.b16 %v35
  %v127 = vunpack.c.h.b16 %v35
  %v128 = vunpack.c.l.b16 %v36
  %v129 = vunpack.c.h.b16 %v36
  %v130 = vunpack.c.l.b16 %v37
  %v131 = vunpack.c.h.b16 %v37
  %v132 = vunpack.c.l.b16 %v38
  %v133 = vunpack.c.h.b16 %v38
  %v134 = vunpack.c.l.b16 %v39
  %v135 = vunpack.c.h.b16 %v39
  %v136 = vunpack.c.l.b16 %v40
  %v137 = vunpack.c.h.b16 %v40
  %v138 = vunpack.c.l.b16 %v41
  %v139 = vunpack.c.h.b16 %v41
  %v140 = vunpack.c.l.b16 %v42
  %v141 = vunpack.c.h.b16 %v42
  %v142 = vunpack.c.l.b16 %v43
  %v143 = vunpack.c.h.b16 %v43
  %v144 = vunpack.c.l.b16 %v44
  %v145 = vunpack.c.h.b16 %v44
  %v146 = vunpack.c.l.b16 %v45
  %v147 = vunpack.c.h.b16 %v45
  %v148 = vunpack.c.l.b16 %v46
  %v149 = vunpack.c.h.b16 %v46
  %v150 = vunpack.c.l.b16 %v47
  %v151 = vunpack.c.h.b16 %v47
  %v152 = vunpack.c.l.b16 %v48
  %v153 = vunpack.c.h.b16 %v48
  %v154 = vunpack.c.l.b16 %v49
  %v155 = vunpack.c.h.b16 %v49
  %v156 = vunpack.c.l.b16 %v50
  %v157 = vunpack.c.h.b16 %v50
  %v158 = vunpack.c.l.b16 %v51
  %v159 = vunpack.c.h.b16 %v51
  %v160 = vpack.c.b16 %v98, %v96
  %v161 = vpack.c.b16 %v99, %v97
  %v162 = vpack.c.b16 %v102, %v100
  %v163 = vpack.c.b16 %v103, %v101
  %v164 = vpack.c.b16 %v106, %v104
  %v165 = vpack.c.b16 %v107, %v105
  %v166 = vpack.c.b16 %v110, %v108
  %v167 = vpack.c.b16 %v111, %v109
  %v168 = vpack.c.b16 %v114, %v112
  %v169 = vpack.c.b16 %v115, %v113
  %v170 = vpack.c.b16 %v118, %v116
  %v171 = vpack.c.b16 %v119, %v117
  %v172 = vpack.c.b16 %v122, %v120
  %v173 = vpack.c.b16 %v123, %v121
  %v174 = vpack.c.b16 %v126, %v124
  %v175 = vpack.c.b16 %v127, %v125
  %v176 = vpack.c.b16 %v130, %v128
  %v177 = vpack.c.b16 %v131, %v129
  %v178 = vpack.c.b16 %v134, %v132
  %v179 = vpack.c.b16 %v135, %v133
  %v180 = vpack.c.b16 %v138, %v136
  %v181 = vpack.c.b16 %v139, %v137
  %v182 = vpack.c.b16 %v142, %v140
  %v183 = vpack.c.b16 %v143, %v141
  %v184 = vpack.c.b16 %v146, %v144
  %v185 = vpack.c.b16 %v147, %v145
  %v186 = vpack.c.b16 %v150, %v148
  %v187 = vpack.c.b16 %v151, %v149
  %v188 = vpack.c.b16 %v154, %v152
  %v189 = vpack.c.b16 %v155, %v153
  %v190 = vpack.c.b16 %v158, %v156
  %v191 = vpack.c.b16 %v159, %v157
  %224 = vmatprep.subr.bf16.mxu0 %v161
  %225 = vmatpush1.bf16.msra.mxu0 %v160
  %226 = vmatprep.subr.bf16.mxu0 %v163
  %227 = vmatpush1.bf16.msra.mxu0 %v162
  %228 = vmatprep.subr.bf16.mxu0 %v165
  %229 = vmatpush1.bf16.msra.mxu0 %v164
  %230 = vmatprep.subr.bf16.mxu0 %v167
  %231 = vmatpush1.bf16.msra.mxu0 %v166
  %232 = vmatprep.subr.bf16.mxu0 %v169
  %233 = vmatpush1.bf16.msra.mxu0 %v168
  %234 = vmatprep.subr.bf16.mxu0 %v171
  %235 = vmatpush1.bf16.msra.mxu0 %v170
  %236 = vmatprep.subr.bf16.mxu0 %v173
  %237 = vmatpush1.bf16.msra.mxu0 %v172
  %238 = vmatprep.subr.bf16.mxu0 %v175
  %239 = vmatpush1.bf16.msra.mxu0 %v174
  %240 = vmatprep.subr.bf16.mxu0 %v177
  %241 = vmatpush1.bf16.msra.mxu0 %v176
  %242 = vmatprep.subr.bf16.mxu0 %v179
  %243 = vmatpush1.bf16.msra.mxu0 %v178
  %244 = vmatprep.subr.bf16.mxu0 %v181
  %245 = vmatpush1.bf16.msra.mxu0 %v180
  %246 = vmatprep.subr.bf16.mxu0 %v183
  %247 = vmatpush1.bf16.msra.mxu0 %v182
  %248 = vmatprep.subr.bf16.mxu0 %v185
  %249 = vmatpush1.bf16.msra.mxu0 %v184
  %250 = vmatprep.subr.bf16.mxu0 %v187
  %251 = vmatpush1.bf16.msra.mxu0 %v186
  %252 = vmatprep.subr.bf16.mxu0 %v189
  %253 = vmatpush1.bf16.msra.mxu0 %v188
  %254 = vmatprep.subr.bf16.mxu0 %v191
  %255 = vmatpush1.bf16.msra.mxu0 %v190
  %256 = vmatprep.mubr.bf16.mxu0 %v19
  %257 = vmatmul.mubr.bf16.gmra.mrb[0].mxu0 %v18
  %v258 = vpop.f32.mrb[0].mxu0
  %v259 = vadd.f32 %v57, %v258
  %v260 = vpop.f32.mrb[0].mxu0
  %v261 = vadd.f32 %v61, %v260
  %v262 = vpop.f32.mrb[0].mxu0
  %v263 = vadd.f32 %v57, %v262
  %v264 = vpop.f32.mrb[0].mxu0
  %v265 = vadd.f32 %v61, %v264
  %266 = vdwg.mxu0
  %v267 = vmax.f32 %v259, 0.0
  %v268 = vmax.f32 %v261, 0.0
  %v269 = vmax.f32 %v263, 0.0
  %v270 = vmax.f32 %v265, 0.0
  %v271 = vadd.f32 %v267, %v14
  %v272 = vadd.f32 %v268, %v15
  %v273 = vadd.f32 %v269, %v16
  %v274 = vadd.f32 %v270, %v17
  %275 = vst [vmem:[%s3] sm:$0xff] %v271
  %276 = vst [vmem:[%s3 + $0x8] sm:$0xff] %v272
  %277 = vst [vmem:[%s3 + $0x10] sm:$0xff] %v273
  %278 = vst [vmem:[%s3 + $0x18] sm:$0xff] %v274
  // Predicated region
  $region14: #{apply.1} parent=0 // pred_check
    _
  $region15: #{apply.1} parent=0 // pred_check_branch
    %280 = sbr.rel (0) target = $region17
  $region16: #{apply.1} parent=0 // pred_region
    _
  $region17: #{apply.1} parent=0 // pred_fallthru
    _
  // Predicated region
  $region18: #{apply.1} parent=0 // pred_check
    _
  $region19: #{apply.1} parent=0 // pred_check_branch
    %282 = sbr.rel (0) target = $region21
  $region20: #{apply.1} parent=0 // pred_region
    _
  $region21: #{apply.1} parent=0 // pred_fallthru
    _

</llo_original>
